<compile_context>
chip_gen: v7x
topology: tpu7x:2x2x1
jax: 0.10.0
libtpu: 0.0.40
codegen_flags: <defaults>
</compile_context>

<pallas_src>
import jax
import jax.numpy as jnp
from jax.experimental import pallas as pl
from jax.experimental.pallas import tpu as pltpu


def _round_up(n: int, m: int) -> int:
    return ((n + m - 1) // m) * m


def mlp_kernel(x_ref, w1_ref, b1_ref, w2_ref, b2_ref, o_ref):
    # fc1: [TB, D] @ [D, H_pad] + [1, H_pad]   (MXU, f32 accumulate)
    h = jnp.dot(x_ref[...], w1_ref[...], preferred_element_type=jnp.float32)
    h = h + b1_ref[...]
    # fc2: [TB, H_pad] @ [H_pad, C_pad] + [1, C_pad]
    acc = jnp.dot(h, w2_ref[...], preferred_element_type=jnp.float32)
    o_ref[...] = (acc + b2_ref[...]).astype(o_ref.dtype)


def nn_forward(x, w1, b1, w2, b2):
    """Forward pass of the PyTorch NN module: fc2(fc1(x)).

    x  : [B, input_size]
    w1 : [input_size, 50]   (transposed vs. PyTorch's [50, input_size])
    b1 : [1, 50]
    w2 : [50, num_classes]  (transposed vs. PyTorch's [num_classes, 50])
    b2 : [1, num_classes]
    returns [B, num_classes]
    """
    B, D = x.shape
    H = w1.shape[1]
    C = w2.shape[1]

    # --- Pad hidden & output lane dims to multiples of 128 (lane-dense). ---
    H_pad = _round_up(max(H, 128), 128)
    C_pad = _round_up(max(C, 128), 128)

    w1_pad = jnp.zeros((D, H_pad), jnp.float32).at[:, :H].set(w1.astype(jnp.float32))
    b1_pad = jnp.zeros((1, H_pad), jnp.float32).at[:, :H].set(b1.astype(jnp.float32))
    w2_pad = jnp.zeros((H_pad, C_pad), jnp.float32).at[:H, :C].set(w2.astype(jnp.float32))
    b2_pad = jnp.zeros((1, C_pad), jnp.float32).at[:, :C].set(b2.astype(jnp.float32))

    # --- Batch tiling: large tiles when B is big, single tile when small. ---
    TB = min(512, _round_up(B, 8))
    B_pad = _round_up(B, TB)
    if B_pad != B:
        x_in = jnp.zeros((B_pad, D), x.dtype).at[:B, :].set(x)
    else:
        x_in = x

    grid = (B_pad // TB,)
    out_pad = pl.pallas_call(
        mlp_kernel,
        out_shape=jax.ShapeDtypeStruct((B_pad, C_pad), x.dtype),
        grid=grid,
        in_specs=[
            pl.BlockSpec((TB, D), lambda i: (i, 0)),          # activations, tiled over batch
            pl.BlockSpec((D, H_pad), lambda i: (0, 0)),       # fc1 weight, VMEM-resident
            pl.BlockSpec((1, H_pad), lambda i: (0, 0)),       # fc1 bias,   VMEM-resident
            pl.BlockSpec((H_pad, C_pad), lambda i: (0, 0)),   # fc2 weight, VMEM-resident
            pl.BlockSpec((1, C_pad), lambda i: (0, 0)),       # fc2 bias,   VMEM-resident
        ],
        out_specs=pl.BlockSpec((TB, C_pad), lambda i: (i, 0)),
        compiler_params=pltpu.CompilerParams(
            dimension_semantics=("parallel",),  # lets v7x shard batch over its 2 TCs
        ),
    )(x_in, w1_pad, b1_pad, w2_pad, b2_pad)

    return out_pad[:B, :C]


if __name__ == "__main__":
    # Shapes consistent with the module: input_size=32, num_classes=10,
    # hidden fixed at 50 by the module definition, batch=8.
    batch, input_size, hidden, num_classes = 8, 32, 50, 10

    key = jax.random.PRNGKey(0)
    kx, kw1, kb1, kw2, kb2 = jax.random.split(key, 5)

    x = jax.random.normal(kx, (batch, input_size), dtype=jnp.float32)

    # Deterministic "PyTorch-like" init (uniform in +/- 1/sqrt(fan_in)).
    lim1 = 1.0 / jnp.sqrt(jnp.float32(input_size))
    w1 = jax.random.uniform(kw1, (input_size, hidden), jnp.float32, -lim1, lim1)
    b1 = jax.random.uniform(kb1, (1, hidden), jnp.float32, -lim1, lim1)

    lim2 = 1.0 / jnp.sqrt(jnp.float32(hidden))
    w2 = jax.random.uniform(kw2, (hidden, num_classes), jnp.float32, -lim2, lim2)
    b2 = jax.random.uniform(kb2, (1, num_classes), jnp.float32, -lim2, lim2)

    fwd = jax.jit(nn_forward)
    out = jax.block_until_ready(fwd(x, w1, b1, w2, b2))

    # Reference check in plain JAX (same math as torch: fc2(fc1(x))).
    ref = (x @ w1 + b1) @ w2 + b2
    assert out.shape == (batch, num_classes)
    assert jnp.allclose(out, ref, atol=1e-4, rtol=1e-4)

    print("KERNEL_OK")
</pallas_src>

<mosaic_0001>
module attributes {stable_mosaic.version = 11 : i64} {
  func.func @mlp_kernel(%arg0: i32, %arg1: memref<8x32xf32, #tpu.memory_space<vmem>>, %arg2: memref<32x128xf32, #tpu.memory_space<vmem>>, %arg3: memref<1x128xf32, #tpu.memory_space<vmem>>, %arg4: memref<128x128xf32, #tpu.memory_space<vmem>>, %arg5: memref<1x128xf32, #tpu.memory_space<vmem>>, %arg6: memref<8x128xf32, #tpu.memory_space<vmem>>) attributes {dimension_semantics = [#tpu.dimension_semantics<parallel>], iteration_bounds = array<i64: 1>, scalar_prefetch = 0 : i64, scratch_operands = 0 : i64, tpu.core_type = #tpu.core_type<tc>, window_params = [{transform_indices = @transform_0, window_bounds = array<i64: 8, 32>}, {pipeline_mode = #tpu.pipeline_mode<synchronous>, transform_indices = @transform_1, window_bounds = array<i64: 32, 128>}, {pipeline_mode = #tpu.pipeline_mode<synchronous>, transform_indices = @transform_2, window_bounds = array<i64: 1, 128>}, {pipeline_mode = #tpu.pipeline_mode<synchronous>, transform_indices = @transform_3, window_bounds = array<i64: 128, 128>}, {pipeline_mode = #tpu.pipeline_mode<synchronous>, transform_indices = @transform_4, window_bounds = array<i64: 1, 128>}, {transform_indices = @transform_5, window_bounds = array<i64: 8, 128>}]} {
    %c0 = arith.constant 0 : index
    %c0_0 = arith.constant 0 : index
    %0 = vector.load %arg1[%c0, %c0_0] : memref<8x32xf32, #tpu.memory_space<vmem>>, vector<8x32xf32>
    %c0_1 = arith.constant 0 : index
    %c0_2 = arith.constant 0 : index
    %1 = vector.load %arg2[%c0_1, %c0_2] : memref<32x128xf32, #tpu.memory_space<vmem>>, vector<32x128xf32>
    %cst = arith.constant dense<0.000000e+00> : vector<8x128xf32>
    %2 = tpu.matmul %0, %1, %cst {dimension_numbers = #tpu.dot_dimension_numbers<[1], [0], [0], [1], [0, 0, 1, 1], [], []>} : vector<8x32xf32>, vector<32x128xf32>, vector<8x128xf32> -> vector<8x128xf32>
    %c0_3 = arith.constant 0 : index
    %c0_4 = arith.constant 0 : index
    %3 = vector.load %arg3[%c0_3, %c0_4] : memref<1x128xf32, #tpu.memory_space<vmem>>, vector<1x128xf32>
    %4 = vector.broadcast %3 : vector<1x128xf32> to vector<8x128xf32>
    %5 = arith.addf %2, %4 : vector<8x128xf32>
    %c0_5 = arith.constant 0 : index
    %c0_6 = arith.constant 0 : index
    %6 = vector.load %arg4[%c0_5, %c0_6] : memref<128x128xf32, #tpu.memory_space<vmem>>, vector<128x128xf32>
    %cst_7 = arith.constant dense<0.000000e+00> : vector<8x128xf32>
    %7 = tpu.matmul %5, %6, %cst_7 {dimension_numbers = #tpu.dot_dimension_numbers<[1], [0], [0], [1], [0, 0, 1, 1], [], []>} : vector<8x128xf32>, vector<128x128xf32>, vector<8x128xf32> -> vector<8x128xf32>
    %c0_8 = arith.constant 0 : index
    %c0_9 = arith.constant 0 : index
    %8 = vector.load %arg5[%c0_8, %c0_9] : memref<1x128xf32, #tpu.memory_space<vmem>>, vector<1x128xf32>
    %9 = vector.broadcast %8 : vector<1x128xf32> to vector<8x128xf32>
    %10 = arith.addf %7, %9 : vector<8x128xf32>
    %c0_10 = arith.constant 0 : index
    %c0_11 = arith.constant 0 : index
    %11 = vector.load %arg6[%c0_10, %c0_11] : memref<8x128xf32, #tpu.memory_space<vmem>>, vector<8x128xf32>
    tpu.vector_store %arg6[%c0_10, %c0_11], %10 {strides = array<i32>} : memref<8x128xf32, #tpu.memory_space<vmem>>, vector<8x128xf32>,
    return
  }
  func.func @transform_0(%arg0: i32) -> (i32, i32) {
    %c0_i32 = arith.constant 0 : i32
    %c0_i32_0 = arith.constant 0 : i32
    return %arg0, %c0_i32 : i32, i32
  }
  func.func @transform_1(%arg0: i32) -> (i32, i32) {
    %c0_i32 = arith.constant 0 : i32
    %c0_i32_0 = arith.constant 0 : i32
    %c0_i32_1 = arith.constant 0 : i32
    return %c0_i32, %c0_i32_0 : i32, i32
  }
  func.func @transform_2(%arg0: i32) -> (i32, i32) {
    %c0_i32 = arith.constant 0 : i32
    %c0_i32_0 = arith.constant 0 : i32
    %c0_i32_1 = arith.constant 0 : i32
    return %c0_i32, %c0_i32_0 : i32, i32
  }
  func.func @transform_3(%arg0: i32) -> (i32, i32) {
    %c0_i32 = arith.constant 0 : i32
    %c0_i32_0 = arith.constant 0 : i32
    %c0_i32_1 = arith.constant 0 : i32
    return %c0_i32, %c0_i32_0 : i32, i32
  }
  func.func @transform_4(%arg0: i32) -> (i32, i32) {
    %c0_i32 = arith.constant 0 : i32
    %c0_i32_0 = arith.constant 0 : i32
    %c0_i32_1 = arith.constant 0 : i32
    return %c0_i32, %c0_i32_0 : i32, i32
  }
  func.func @transform_5(%arg0: i32) -> (i32, i32) {
    %c0_i32 = arith.constant 0 : i32
    %c0_i32_0 = arith.constant 0 : i32
    return %arg0, %c0_i32 : i32, i32
  }
}

</mosaic_0001>

<llo_original>
// kernel: nn_forward.1
$region0: #{nn_forward.1}
  #allocation0 [shape = 'u32[]', space=smem, size = 0x4, offset = 0x4, fixed_abs, tag = 'smem constant byte address 0x4 - core index']
  #allocation1 [shape = 'u32[144,128]{1,0:T(1,128)}', space=vmem, size = 0x12000, scoped, tag = 'internal scratch']
  %s0 = inlined_call_operand.vmem [shape: f32[8,32], index: 0, kind: input, shape index: {}]
  %s1 = inlined_call_operand.vmem [shape: f32[32,128], index: 1, kind: input, shape index: {}]
  %s2 = inlined_call_operand.vmem [shape: f32[1,128], index: 2, kind: input, shape index: {}]
  %s3 = inlined_call_operand.vmem [shape: f32[128,128], index: 3, kind: input, shape index: {}]
  %s4 = inlined_call_operand.vmem [shape: f32[1,128], index: 4, kind: input, shape index: {}]
  %s5 = inlined_call_operand.hbm [shape: f32[8,128], index: 5, kind: output, shape index: {}]
  %s6 = sld [smem:[#allocation0]]
  $region30: #{nn_forward.1} parent=0
    _
  %s8 = ssub.s32 1, %s6
  %s9 = scalar_select 0, %s8, %s6
  $region1: #{nn_forward.1} parent=0
    #allocation2 [shape = 'u8[4096]{0}', space=vmem, size = 0x1000, scoped, tag = 'output window, operand 0, single buffered']
    #allocation3 [shape = 's32[1]{0}', space=sflag, size = 0x4, scoped, tag = 'scoped memory for nn_forward.1']
    %10 = vsyncpa [#allocation3], 0
    // Predicated region
    $region2: #{nn_forward.1} parent=1 // pred_check
      _
    $region3: #{nn_forward.1} parent=1 // pred_check_branch
      %12 = sbr.rel (0) target = $region5
    $region4: #{nn_forward.1} parent=1 // pred_region
      _
    $region5: #{nn_forward.1} parent=1 // pred_fallthru
      _
    // Predicated region
    $region6: #{nn_forward.1} parent=1 // pred_check
      _
    $region7: #{nn_forward.1} parent=1 // pred_check_branch
      %14 = sbr.rel (0) target = $region9
    $region8: #{nn_forward.1} parent=1 // pred_region
      _
    $region9: #{nn_forward.1} parent=1 // pred_fallthru
      _
    // Predicated region
    $region10: #{nn_forward.1} parent=1 // pred_check
      _
    $region11: #{nn_forward.1} parent=1 // pred_check_branch
      %16 = sbr.rel (0) target = $region13
    $region12: #{nn_forward.1} parent=1 // pred_region
      _
    $region13: #{nn_forward.1} parent=1 // pred_fallthru
      _
    // Predicated region
    $region14: #{nn_forward.1} parent=1 // pred_check
      _
    $region15: #{nn_forward.1} parent=1 // pred_check_branch
      %18 = sbr.rel (0) target = $region17
    $region16: #{nn_forward.1} parent=1 // pred_region
      _
    $region17: #{nn_forward.1} parent=1 // pred_fallthru
      _
    // Predicated region
    $region18: #{nn_forward.1} parent=1 // pred_check
      _
    $region19: #{nn_forward.1} parent=1 // pred_check_branch
      %20 = sbr.rel (0) target = $region21
    $region20: #{nn_forward.1} parent=1 // pred_region
      _
    $region21: #{nn_forward.1} parent=1 // pred_fallthru
      _
    %v21 = vld [vmem:[%s0] sm:$0xff]
    %v22 = vld [vmem:[%s1] sm:$0xff]
    %v23 = vld [vmem:[%s1 + $0x8] sm:$0xff]
    %v24 = vld [vmem:[%s1 + $0x10] sm:$0xff]
    %v25 = vld [vmem:[%s1 + $0x18] sm:$0xff]
    %v26 = vld [vmem:[%s2] sm:$0x1]
    %v28 = vlaneseq
    %v29 = vshrl.u32 %v28, 7
    %v30 = vsub.s32 0, %v29
    %v31 = vrot.slane %v26, %v30
    %vm33 = vcmask 261120
    %v35 = vsel %vm33, %v21, 0
    %37 = vmatprep.subr.mxu0 0.0
    %38 = vmatpush1.msra.mxu0 %v22
    %39 = vmatprep.subr.mxu0 0.0
    %40 = vmatpush1.msra.mxu0 %v23
    %41 = vmatprep.subr.mxu0 0.0
    %42 = vmatpush1.msra.mxu0 %v24
    %43 = vmatprep.subr.mxu0 0.0
    %44 = vmatpush1.msra.mxu0 %v25
    %45 = vmatprep.subr.mxu0 0.0
    %46 = vmatpush1.msra.mxu0 0.0
    %47 = vmatprep.subr.mxu0 0.0
    %48 = vmatpush1.msra.mxu0 0.0
    %49 = vmatprep.subr.mxu0 0.0
    %50 = vmatpush1.msra.mxu0 0.0
    %51 = vmatprep.subr.mxu0 0.0
    %52 = vmatpush1.msra.mxu0 0.0
    %53 = vmatprep.subr.mxu0 0.0
    %54 = vmatpush1.msra.mxu0 0.0
    %55 = vmatprep.subr.mxu0 0.0
    %56 = vmatpush1.msra.mxu0 0.0
    %57 = vmatprep.subr.mxu0 0.0
    %58 = vmatpush1.msra.mxu0 0.0
    %59 = vmatprep.subr.mxu0 0.0
    %60 = vmatpush1.msra.mxu0 0.0
    %61 = vmatprep.subr.mxu0 0.0
    %62 = vmatpush1.msra.mxu0 0.0
    %63 = vmatprep.subr.mxu0 0.0
    %64 = vmatpush1.msra.mxu0 0.0
    %65 = vmatprep.subr.mxu0 0.0
    %66 = vmatpush1.msra.mxu0 0.0
    %67 = vmatprep.subr.mxu0 0.0
    %68 = vmatpush1.msra.mxu0 0.0
    %69 = vmatprep.subr.mxu0 0.0
    %70 = vmatpush1.msra.mxu0 0.0
    %71 = vmatprep.subr.mxu0 0.0
    %72 = vmatpush1.msra.mxu0 0.0
    %73 = vmatprep.subr.mxu0 0.0
    %74 = vmatpush1.msra.mxu0 0.0
    %75 = vmatprep.subr.mxu0 0.0
    %76 = vmatpush1.msra.mxu0 0.0
    %77 = vmatprep.subr.mxu0 0.0
    %78 = vmatpush1.msra.mxu0 0.0
    %79 = vmatprep.subr.mxu0 0.0
    %80 = vmatpush1.msra.mxu0 0.0
    %81 = vmatprep.subr.mxu0 0.0
    %82 = vmatpush1.msra.mxu0 0.0
    %83 = vmatprep.subr.mxu0 0.0
    %84 = vmatpush1.msra.mxu0 0.0
    %85 = vmatprep.subr.mxu0 0.0
    %86 = vmatpush1.msra.mxu0 0.0
    %87 = vmatprep.subr.mxu0 0.0
    %88 = vmatpush1.msra.mxu0 0.0
    %89 = vmatprep.subr.mxu0 0.0
    %90 = vmatpush1.msra.mxu0 0.0
    %91 = vmatprep.subr.mxu0 0.0
    %92 = vmatpush1.msra.mxu0 0.0
    %93 = vmatprep.subr.mxu0 0.0
    %94 = vmatpush1.msra.mxu0 0.0
    %95 = vmatprep.subr.mxu0 0.0
    %96 = vmatpush1.msra.mxu0 0.0
    %97 = vmatprep.subr.mxu0 0.0
    %98 = vmatpush1.msra.mxu0 0.0
    %99 = vmatprep.subr.mxu0 0.0
    %100 = vmatpush1.msra.mxu0 0.0
    %101 = vmatprep.mubr.f32.mxu0 0.0
    %102 = vmatmul.mubr.f32.gmra.mrb[0].mxu0 %v35
    %v103 = vpop.f32.mrb[0].mxu0
    %v104 = vadd.f32 %v31, %v103
    %v105 = vpop.f32.mrb[0].mxu0
    %106 = vdwg.mxu0
    %v107 = vld [vmem:[%s3] sm:$0xff]
    %v108 = vld [vmem:[%s3 + $0x8] sm:$0xff]
    %v109 = vld [vmem:[%s3 + $0x10] sm:$0xff]
    %v110 = vld [vmem:[%s3 + $0x18] sm:$0xff]
    %v111 = vld [vmem:[%s3 + $0x20] sm:$0xff]
    %v112 = vld [vmem:[%s3 + $0x28] sm:$0xff]
    %v113 = vld [vmem:[%s3 + $0x30] sm:$0xff]
    %v114 = vld [vmem:[%s3 + $0x38] sm:$0xff]
    %v115 = vld [vmem:[%s3 + $0x40] sm:$0xff]
    %v116 = vld [vmem:[%s3 + $0x48] sm:$0xff]
    %v117 = vld [vmem:[%s3 + $0x50] sm:$0xff]
    %v118 = vld [vmem:[%s3 + $0x58] sm:$0xff]
    %v119 = vld [vmem:[%s3 + $0x60] sm:$0xff]
    %v120 = vld [vmem:[%s3 + $0x68] sm:$0xff]
    %v121 = vld [vmem:[%s3 + $0x70] sm:$0xff]
    %v122 = vld [vmem:[%s3 + $0x78] sm:$0xff]
    %v123 = vld [vmem:[%s4] sm:$0x1]
    %v125 = vlaneseq
    %v126 = vshrl.u32 %v125, 7
    %v127 = vsub.s32 0, %v126
    %v128 = vrot.slane %v123, %v127
    %130 = vmatprep.subr.mxu0 0.0
    %131 = vmatpush1.msra.mxu0 %v107
    %132 = vmatprep.subr.mxu0 0.0
    %133 = vmatpush1.msra.mxu0 %v108
    %134 = vmatprep.subr.mxu0 0.0
    %135 = vmatpush1.msra.mxu0 %v109
    %136 = vmatprep.subr.mxu0 0.0
    %137 = vmatpush1.msra.mxu0 %v110
    %138 = vmatprep.subr.mxu0 0.0
    %139 = vmatpush1.msra.mxu0 %v111
    %140 = vmatprep.subr.mxu0 0.0
    %141 = vmatpush1.msra.mxu0 %v112
    %142 = vmatprep.subr.mxu0 0.0
    %143 = vmatpush1.msra.mxu0 %v113
    %144 = vmatprep.subr.mxu0 0.0
    %145 = vmatpush1.msra.mxu0 %v114
    %146 = vmatprep.subr.mxu0 0.0
    %147 = vmatpush1.msra.mxu0 %v115
    %148 = vmatprep.subr.mxu0 0.0
    %149 = vmatpush1.msra.mxu0 %v116
    %150 = vmatprep.subr.mxu0 0.0
    %151 = vmatpush1.msra.mxu0 %v117
    %152 = vmatprep.subr.mxu0 0.0
    %153 = vmatpush1.msra.mxu0 %v118
    %154 = vmatprep.subr.mxu0 0.0
    %155 = vmatpush1.msra.mxu0 %v119
    %156 = vmatprep.subr.mxu0 0.0
    %157 = vmatpush1.msra.mxu0 %v120
    %158 = vmatprep.subr.mxu0 0.0
    %159 = vmatpush1.msra.mxu0 %v121
    %160 = vmatprep.subr.mxu0 0.0
    %161 = vmatpush1.msra.mxu0 %v122
    %162 = vmatprep.subr.mxu0 0.0
    %163 = vmatpush1.msra.mxu0 0.0
    %164 = vmatprep.subr.mxu0 0.0
    %165 = vmatpush1.msra.mxu0 0.0
    %166 = vmatprep.subr.mxu0 0.0
    %167 = vmatpush1.msra.mxu0 0.0
    %168 = vmatprep.subr.mxu0 0.0
    %169 = vmatpush1.msra.mxu0 0.0
    %170 = vmatprep.subr.mxu0 0.0
    %171 = vmatpush1.msra.mxu0 0.0
    %172 = vmatprep.subr.mxu0 0.0
    %173 = vmatpush1.msra.mxu0 0.0
    %174 = vmatprep.subr.mxu0 0.0
    %175 = vmatpush1.msra.mxu0 0.0
    %176 = vmatprep.subr.mxu0 0.0
    %177 = vmatpush1.msra.mxu0 0.0
    %178 = vmatprep.subr.mxu0 0.0
    %179 = vmatpush1.msra.mxu0 0.0
    %180 = vmatprep.subr.mxu0 0.0
    %181 = vmatpush1.msra.mxu0 0.0
    %182 = vmatprep.subr.mxu0 0.0
    %183 = vmatpush1.msra.mxu0 0.0
    %184 = vmatprep.subr.mxu0 0.0
    %185 = vmatpush1.msra.mxu0 0.0
    %186 = vmatprep.subr.mxu0 0.0
    %187 = vmatpush1.msra.mxu0 0.0
    %188 = vmatprep.subr.mxu0 0.0
    %189 = vmatpush1.msra.mxu0 0.0
    %190 = vmatprep.subr.mxu0 0.0
    %191 = vmatpush1.msra.mxu0 0.0
    %192 = vmatprep.subr.mxu0 0.0
    %193 = vmatpush1.msra.mxu0 0.0
    %194 = vmatprep.mubr.f32.mxu0 0.0
    %195 = vmatmul.mubr.f32.gmra.mrb[0].mxu0 %v104
    %v196 = vpop.f32.mrb[0].mxu0
    %v197 = vadd.f32 %v128, %v196
    %v198 = vpop.f32.mrb[0].mxu0
    %199 = vdwg.mxu0
    %200 = vst [vmem:[#allocation2] sm:$0xff] %v197
    // Predicated region
    $region22: #{nn_forward.1} parent=1 // pred_check
      _
    $region23: #{nn_forward.1} parent=1 // pred_check_branch
      %202 = sbr.rel (0) target = $region25
    $region24: #{nn_forward.1} parent=1 // pred_region
      %s204 = ssub.s32 128, 128
      %205 = vsyncadd [#allocation3], %s204
      %s207 = sshll.u32 [#allocation2], 4
      %s208 = int_to_ptr.vmem [resolvable:$true] %s207
      %210 = dma.vmem_to_hbm [thread:$0]  %s208, 128, %s5, [#allocation3]
    $region25: #{nn_forward.1} parent=1 // pred_fallthru
      _
    // Predicated region
    $region26: #{nn_forward.1} parent=1 // pred_check
      _
    $region27: #{nn_forward.1} parent=1 // pred_check_branch
      %212 = sbr.rel (0) target = $region29
    $region28: #{nn_forward.1} parent=1 // pred_region
      %213 = dma.done [#allocation3], 128
    $region29: #{nn_forward.1} parent=1 // pred_fallthru
      _
    %214 = vsyncpa [#allocation3], 1

</llo_original>
